<compile_context>
chip_gen: v7x
topology: tpu7x:2x2x1
jax: 0.10.0
libtpu: 0.0.40
codegen_flags: <defaults>
</compile_context>

<pallas_src>
import functools

import jax
import jax.numpy as jnp
from jax.experimental import pallas as pl
from jax.experimental.pallas import tpu as pltpu


def _gaussian_smearing_kernel(coeff_ref, dist_ref, offset_ref, out_ref):
    # coeff_ref : SMEM (1, 1) scalar
    # dist_ref  : VMEM (block_e, 1)
    # offset_ref: VMEM (1, num_rbf)
    # out_ref   : VMEM (block_e, num_rbf)
    coeff = coeff_ref[0, 0]
    diff = dist_ref[...] - offset_ref[...]          # broadcast -> (block_e, num_rbf)
    out_ref[...] = jnp.exp(coeff * diff * diff).astype(out_ref.dtype)


@functools.partial(jax.jit, static_argnames=("block_e", "out_dtype"))
def gaussian_smearing(dist, offset, coeff, *, block_e=4096, out_dtype=jnp.float32):
    """dist: (E,) f32, offset: (num_rbf,) f32, coeff: scalar -> (E, num_rbf)."""
    E = dist.shape[0]
    num_rbf = offset.shape[0]

    # Single-block case: use exactly E rows (block == full array dim is always a
    # legal block shape) so no padded rows are computed at all.  Otherwise keep
    # the large block; block_e % 8 == 0 and Pallas masks the ragged last block.
    blk = E if E <= block_e else block_e

    dist_2d = dist.astype(jnp.float32).reshape(E, 1)
    offset_2d = offset.astype(jnp.float32).reshape(1, num_rbf)
    coeff_2d = jnp.asarray(coeff, dtype=jnp.float32).reshape(1, 1)

    grid = (pl.cdiv(E, blk),)

    out = pl.pallas_call(
        _gaussian_smearing_kernel,
        out_shape=jax.ShapeDtypeStruct((E, num_rbf), out_dtype),
        grid_spec=pltpu.PrefetchScalarGridSpec(
            num_scalar_prefetch=0,
            grid=grid,
            in_specs=[
                pl.BlockSpec(memory_space=pltpu.MemorySpace.SMEM),   # coeff
                pl.BlockSpec((blk, 1), lambda i: (i, 0)),            # dist
                pl.BlockSpec((1, num_rbf), lambda i: (0, 0)),        # offset
            ],
            out_specs=pl.BlockSpec((blk, num_rbf), lambda i: (i, 0)),
        ),
        compiler_params=pltpu.CompilerParams(
            dimension_semantics=("parallel",)
        ),
    )(coeff_2d, dist_2d, offset_2d)

    return out


def init_gaussian_smearing_params(cutoff_lower=0.0, cutoff_upper=5.0, num_rbf=50):
    """Deterministic parameter init matching GaussianSmearing._initial_params."""
    offset = jnp.linspace(cutoff_lower, cutoff_upper, num_rbf, dtype=jnp.float32)
    coeff = -0.5 / (offset[1] - offset[0]) ** 2
    return offset, coeff


if __name__ == "__main__":
    cutoff_lower, cutoff_upper, num_rbf = 0.0, 5.0, 50
    offset, coeff = init_gaussian_smearing_params(cutoff_lower, cutoff_upper, num_rbf)

    key = jax.random.PRNGKey(0)
    E = 200  # number of edge distances
    dist = jax.random.uniform(
        key, (E,), dtype=jnp.float32, minval=cutoff_lower, maxval=cutoff_upper
    )

    # Reference (plain JAX) check of the exact PyTorch semantics.
    ref = jnp.exp(coeff * (dist[:, None] - offset[None, :]) ** 2)

    # 1) Default path: single block of exactly E rows.
    out = gaussian_smearing(dist, offset, coeff)
    out = jax.block_until_ready(out)
    assert out.shape == (E, num_rbf)
    assert jnp.allclose(out, ref, atol=1e-6, rtol=1e-6)

    # 2) Multi-block path with a ragged final block (200 = 128 + 72) to exercise
    #    the masked last-block handling (no wrapper pad / slice involved).
    out2 = gaussian_smearing(dist, offset, coeff, block_e=128)
    out2 = jax.block_until_ready(out2)
    assert jnp.allclose(out2, ref, atol=1e-6, rtol=1e-6)

    print("KERNEL_OK")
</pallas_src>

<mosaic_0001>
module attributes {stable_mosaic.version = 11 : i64} {
  func.func @_gaussian_smearing_kernel(%arg0: i32, %arg1: memref<1x1xf32, #tpu.memory_space<smem>>, %arg2: memref<200x1xf32, #tpu.memory_space<vmem>>, %arg3: memref<1x50xf32, #tpu.memory_space<vmem>>, %arg4: memref<200x50xf32, #tpu.memory_space<vmem>>) attributes {dimension_semantics = [#tpu.dimension_semantics<parallel>], iteration_bounds = array<i64: 1>, scalar_prefetch = 0 : i64, scratch_operands = 0 : i64, tpu.core_type = #tpu.core_type<tc>, window_params = [{transform_indices = @transform_0, window_bounds = array<i64: 1, 1>}, {transform_indices = @transform_1, window_bounds = array<i64: 200, 1>}, {pipeline_mode = #tpu.pipeline_mode<synchronous>, transform_indices = @transform_2, window_bounds = array<i64: 1, 50>}, {transform_indices = @transform_3, window_bounds = array<i64: 200, 50>}]} {
    %c0 = arith.constant 0 : index
    %c0_0 = arith.constant 0 : index
    %0 = memref.load %arg1[%c0, %c0_0] : memref<1x1xf32, #tpu.memory_space<smem>>
    %c0_1 = arith.constant 0 : index
    %c0_2 = arith.constant 0 : index
    %1 = vector.load %arg2[%c0_1, %c0_2] : memref<200x1xf32, #tpu.memory_space<vmem>>, vector<200x1xf32>
    %c0_3 = arith.constant 0 : index
    %c0_4 = arith.constant 0 : index
    %2 = vector.load %arg3[%c0_3, %c0_4] : memref<1x50xf32, #tpu.memory_space<vmem>>, vector<1x50xf32>
    %3 = vector.broadcast %1 : vector<200x1xf32> to vector<200x50xf32>
    %4 = vector.broadcast %2 : vector<1x50xf32> to vector<200x50xf32>
    %5 = arith.subf %3, %4 : vector<200x50xf32>
    %6 = vector.broadcast %0 : f32 to vector<200x50xf32>
    %7 = arith.mulf %6, %5 : vector<200x50xf32>
    %8 = arith.mulf %7, %5 : vector<200x50xf32>
    %9 = math.exp %8 : vector<200x50xf32>
    %c0_5 = arith.constant 0 : index
    %c0_6 = arith.constant 0 : index
    %10 = vector.load %arg4[%c0_5, %c0_6] : memref<200x50xf32, #tpu.memory_space<vmem>>, vector<200x50xf32>
    tpu.vector_store %arg4[%c0_5, %c0_6], %9 {strides = array<i32>} : memref<200x50xf32, #tpu.memory_space<vmem>>, vector<200x50xf32>,
    return
  }
  func.func @transform_0(%arg0: i32) -> (i32, i32) {
    %c0_i32 = arith.constant 0 : i32
    %c0_i32_0 = arith.constant 0 : i32
    %c0_i32_1 = arith.constant 0 : i32
    return %c0_i32, %c0_i32_0 : i32, i32
  }
  func.func @transform_1(%arg0: i32) -> (i32, i32) {
    %c0_i32 = arith.constant 0 : i32
    %c0_i32_0 = arith.constant 0 : i32
    return %arg0, %c0_i32 : i32, i32
  }
  func.func @transform_2(%arg0: i32) -> (i32, i32) {
    %c0_i32 = arith.constant 0 : i32
    %c0_i32_0 = arith.constant 0 : i32
    %c0_i32_1 = arith.constant 0 : i32
    return %c0_i32, %c0_i32_0 : i32, i32
  }
  func.func @transform_3(%arg0: i32) -> (i32, i32) {
    %c0_i32 = arith.constant 0 : i32
    %c0_i32_0 = arith.constant 0 : i32
    return %arg0, %c0_i32 : i32, i32
  }
}

</mosaic_0001>

<llo_original>
// kernel: gaussian_smearing.1
$region0: #{gaussian_smearing.1}
  #allocation0 [shape = 'u32[]', space=smem, size = 0x4, offset = 0x4, fixed_abs, tag = 'smem constant byte address 0x4 - core index']
  #allocation1 [shape = 'u32[144,128]{1,0:T(1,128)}', space=vmem, size = 0x12000, scoped, tag = 'internal scratch']
  #allocation2 [shape = 'f32[1,1]{1,0:T(1,128)S(6)}', space=smem, size = 0x200, scoped, tag = 'scoped memory for gaussian_smearing.1']
  %s0 = inlined_call_operand.<no memory space> [shape: f32[1,1], index: 0, kind: input, shape index: {}]
  %s1 = inlined_call_operand.vmem [shape: f32[200,1], index: 1, kind: input, shape index: {}]
  %s2 = inlined_call_operand.vmem [shape: f32[1,50], index: 2, kind: input, shape index: {}]
  %s3 = inlined_call_operand.vmem [shape: f32[200,50], index: 3, kind: output, shape index: {}]
  %s4 = sld [smem:[#allocation0]]
  $region22: #{gaussian_smearing.1} parent=0
    _
  %s6 = ssub.s32 1, %s4
  %s7 = scalar_select 0, %s6, %s4
  %8 = sst [smem:[#allocation2]] %s0
  // Predicated region
  $region2: #{gaussian_smearing.1} parent=0 // pred_check
    _
  $region3: #{gaussian_smearing.1} parent=0 // pred_check_branch
    %10 = sbr.rel (0) target = $region5
  $region4: #{gaussian_smearing.1} parent=0 // pred_region
    _
  $region5: #{gaussian_smearing.1} parent=0 // pred_fallthru
    _
  // Predicated region
  $region6: #{gaussian_smearing.1} parent=0 // pred_check
    _
  $region7: #{gaussian_smearing.1} parent=0 // pred_check_branch
    %12 = sbr.rel (0) target = $region9
  $region8: #{gaussian_smearing.1} parent=0 // pred_region
    _
  $region9: #{gaussian_smearing.1} parent=0 // pred_fallthru
    _
  // Predicated region
  $region10: #{gaussian_smearing.1} parent=0 // pred_check
    _
  $region11: #{gaussian_smearing.1} parent=0 // pred_check_branch
    %14 = sbr.rel (0) target = $region13
  $region12: #{gaussian_smearing.1} parent=0 // pred_region
    _
  $region13: #{gaussian_smearing.1} parent=0 // pred_fallthru
    _
  %s15 = sld [smem:[#allocation2]]
  %v16 = vld [vmem:[%s1] sm:$0xff]
  %v17 = vld [vmem:[%s1 + $0x8] sm:$0xff]
  %v18 = vld [vmem:[%s1 + $0x10] sm:$0xff]
  %v19 = vld [vmem:[%s1 + $0x18] sm:$0xff]
  %v20 = vld [vmem:[%s1 + $0x20] sm:$0xff]
  %v21 = vld [vmem:[%s1 + $0x28] sm:$0xff]
  %v22 = vld [vmem:[%s1 + $0x30] sm:$0xff]
  %v23 = vld [vmem:[%s1 + $0x38] sm:$0xff]
  %v24 = vld [vmem:[%s1 + $0x40] sm:$0xff]
  %v25 = vld [vmem:[%s1 + $0x48] sm:$0xff]
  %v26 = vld [vmem:[%s1 + $0x50] sm:$0xff]
  %v27 = vld [vmem:[%s1 + $0x58] sm:$0xff]
  %v28 = vld [vmem:[%s1 + $0x60] sm:$0xff]
  %v29 = vld [vmem:[%s1 + $0x68] sm:$0xff]
  %v30 = vld [vmem:[%s1 + $0x70] sm:$0xff]
  %v31 = vld [vmem:[%s1 + $0x78] sm:$0xff]
  %v32 = vld [vmem:[%s1 + $0x80] sm:$0xff]
  %v33 = vld [vmem:[%s1 + $0x88] sm:$0xff]
  %v34 = vld [vmem:[%s1 + $0x90] sm:$0xff]
  %v35 = vld [vmem:[%s1 + $0x98] sm:$0xff]
  %v36 = vld [vmem:[%s1 + $0xa0] sm:$0xff]
  %v37 = vld [vmem:[%s1 + $0xa8] sm:$0xff]
  %v38 = vld [vmem:[%s1 + $0xb0] sm:$0xff]
  %v39 = vld [vmem:[%s1 + $0xb8] sm:$0xff]
  %v40 = vld [vmem:[%s1 + $0xc0] sm:$0xff]
  %v41 = vld [vmem:[%s2] sm:$0x1]
  %43 = vset.pattern.permute.xlu0 0
  %44 = vperm.xlu0 %43, %v16
  %v45 = vpop.permute.xlu0 %44
  %48 = vset.pattern.permute.xlu0 0
  %49 = vperm.xlu0 %48, %v17
  %v50 = vpop.permute.xlu0 %49
  %53 = vset.pattern.permute.xlu0 0
  %54 = vperm.xlu0 %53, %v18
  %v55 = vpop.permute.xlu0 %54
  %58 = vset.pattern.permute.xlu0 0
  %59 = vperm.xlu0 %58, %v19
  %v60 = vpop.permute.xlu0 %59
  %63 = vset.pattern.permute.xlu0 0
  %64 = vperm.xlu0 %63, %v20
  %v65 = vpop.permute.xlu0 %64
  %68 = vset.pattern.permute.xlu0 0
  %69 = vperm.xlu0 %68, %v21
  %v70 = vpop.permute.xlu0 %69
  %73 = vset.pattern.permute.xlu0 0
  %74 = vperm.xlu0 %73, %v22
  %v75 = vpop.permute.xlu0 %74
  %78 = vset.pattern.permute.xlu0 0
  %79 = vperm.xlu0 %78, %v23
  %v80 = vpop.permute.xlu0 %79
  %83 = vset.pattern.permute.xlu0 0
  %84 = vperm.xlu0 %83, %v24
  %v85 = vpop.permute.xlu0 %84
  %88 = vset.pattern.permute.xlu0 0
  %89 = vperm.xlu0 %88, %v25
  %v90 = vpop.permute.xlu0 %89
  %93 = vset.pattern.permute.xlu0 0
  %94 = vperm.xlu0 %93, %v26
  %v95 = vpop.permute.xlu0 %94
  %98 = vset.pattern.permute.xlu0 0
  %99 = vperm.xlu0 %98, %v27
  %v100 = vpop.permute.xlu0 %99
  %103 = vset.pattern.permute.xlu0 0
  %104 = vperm.xlu0 %103, %v28
  %v105 = vpop.permute.xlu0 %104
  %108 = vset.pattern.permute.xlu0 0
  %109 = vperm.xlu0 %108, %v29
  %v110 = vpop.permute.xlu0 %109
  %113 = vset.pattern.permute.xlu0 0
  %114 = vperm.xlu0 %113, %v30
  %v115 = vpop.permute.xlu0 %114
  %118 = vset.pattern.permute.xlu0 0
  %119 = vperm.xlu0 %118, %v31
  %v120 = vpop.permute.xlu0 %119
  %123 = vset.pattern.permute.xlu0 0
  %124 = vperm.xlu0 %123, %v32
  %v125 = vpop.permute.xlu0 %124
  %128 = vset.pattern.permute.xlu0 0
  %129 = vperm.xlu0 %128, %v33
  %v130 = vpop.permute.xlu0 %129
  %133 = vset.pattern.permute.xlu0 0
  %134 = vperm.xlu0 %133, %v34
  %v135 = vpop.permute.xlu0 %134
  %138 = vset.pattern.permute.xlu0 0
  %139 = vperm.xlu0 %138, %v35
  %v140 = vpop.permute.xlu0 %139
  %143 = vset.pattern.permute.xlu0 0
  %144 = vperm.xlu0 %143, %v36
  %v145 = vpop.permute.xlu0 %144
  %148 = vset.pattern.permute.xlu0 0
  %149 = vperm.xlu0 %148, %v37
  %v150 = vpop.permute.xlu0 %149
  %153 = vset.pattern.permute.xlu0 0
  %154 = vperm.xlu0 %153, %v38
  %v155 = vpop.permute.xlu0 %154
  %158 = vset.pattern.permute.xlu0 0
  %159 = vperm.xlu0 %158, %v39
  %v160 = vpop.permute.xlu0 %159
  %163 = vset.pattern.permute.xlu0 0
  %164 = vperm.xlu0 %163, %v40
  %v165 = vpop.permute.xlu0 %164
  %v168 = vlaneseq
  %v169 = vshrl.u32 %v168, 7
  %v170 = vsub.s32 0, %v169
  %v171 = vrot.slane %v41, %v170
  %v173 = vsub.f32 %v45, %v171
  %v174 = vsub.f32 %v50, %v171
  %v175 = vsub.f32 %v55, %v171
  %v176 = vsub.f32 %v60, %v171
  %v177 = vsub.f32 %v65, %v171
  %v178 = vsub.f32 %v70, %v171
  %v179 = vsub.f32 %v75, %v171
  %v180 = vsub.f32 %v80, %v171
  %v181 = vsub.f32 %v85, %v171
  %v182 = vsub.f32 %v90, %v171
  %v183 = vsub.f32 %v95, %v171
  %v184 = vsub.f32 %v100, %v171
  %v185 = vsub.f32 %v105, %v171
  %v186 = vsub.f32 %v110, %v171
  %v187 = vsub.f32 %v115, %v171
  %v188 = vsub.f32 %v120, %v171
  %v189 = vsub.f32 %v125, %v171
  %v190 = vsub.f32 %v130, %v171
  %v191 = vsub.f32 %v135, %v171
  %v192 = vsub.f32 %v140, %v171
  %v193 = vsub.f32 %v145, %v171
  %v194 = vsub.f32 %v150, %v171
  %v195 = vsub.f32 %v155, %v171
  %v196 = vsub.f32 %v160, %v171
  %v197 = vsub.f32 %v165, %v171
  %v198 = vstv %s15
  %v199 = vmul.f32 %v198, %v173
  %v200 = vmul.f32 %v198, %v174
  %v201 = vmul.f32 %v198, %v175
  %v202 = vmul.f32 %v198, %v176
  %v203 = vmul.f32 %v198, %v177
  %v204 = vmul.f32 %v198, %v178
  %v205 = vmul.f32 %v198, %v179
  %v206 = vmul.f32 %v198, %v180
  %v207 = vmul.f32 %v198, %v181
  %v208 = vmul.f32 %v198, %v182
  %v209 = vmul.f32 %v198, %v183
  %v210 = vmul.f32 %v198, %v184
  %v211 = vmul.f32 %v198, %v185
  %v212 = vmul.f32 %v198, %v186
  %v213 = vmul.f32 %v198, %v187
  %v214 = vmul.f32 %v198, %v188
  %v215 = vmul.f32 %v198, %v189
  %v216 = vmul.f32 %v198, %v190
  %v217 = vmul.f32 %v198, %v191
  %v218 = vmul.f32 %v198, %v192
  %v219 = vmul.f32 %v198, %v193
  %v220 = vmul.f32 %v198, %v194
  %v221 = vmul.f32 %v198, %v195
  %v222 = vmul.f32 %v198, %v196
  %v223 = vmul.f32 %v198, %v197
  %v224 = vmul.f32 %v199, %v173
  %v225 = vmul.f32 %v200, %v174
  %v226 = vmul.f32 %v201, %v175
  %v227 = vmul.f32 %v202, %v176
  %v228 = vmul.f32 %v203, %v177
  %v229 = vmul.f32 %v204, %v178
  %v230 = vmul.f32 %v205, %v179
  %v231 = vmul.f32 %v206, %v180
  %v232 = vmul.f32 %v207, %v181
  %v233 = vmul.f32 %v208, %v182
  %v234 = vmul.f32 %v209, %v183
  %v235 = vmul.f32 %v210, %v184
  %v236 = vmul.f32 %v211, %v185
  %v237 = vmul.f32 %v212, %v186
  %v238 = vmul.f32 %v213, %v187
  %v239 = vmul.f32 %v214, %v188
  %v240 = vmul.f32 %v215, %v189
  %v241 = vmul.f32 %v216, %v190
  %v242 = vmul.f32 %v217, %v191
  %v243 = vmul.f32 %v218, %v192
  %v244 = vmul.f32 %v219, %v193
  %v245 = vmul.f32 %v220, %v194
  %v246 = vmul.f32 %v221, %v195
  %v247 = vmul.f32 %v222, %v196
  %v248 = vmul.f32 %v223, %v197
  %v249 = vmul.f32 %v224, 1.442695
  %v250 = vpow.pop %v249
  %v251 = vmul.f32 %v225, 1.442695
  %v252 = vpow.pop %v251
  %v253 = vmul.f32 %v226, 1.442695
  %v254 = vpow.pop %v253
  %v255 = vmul.f32 %v227, 1.442695
  %v256 = vpow.pop %v255
  %v257 = vmul.f32 %v228, 1.442695
  %v258 = vpow.pop %v257
  %v259 = vmul.f32 %v229, 1.442695
  %v260 = vpow.pop %v259
  %v261 = vmul.f32 %v230, 1.442695
  %v262 = vpow.pop %v261
  %v263 = vmul.f32 %v231, 1.442695
  %v264 = vpow.pop %v263
  %v265 = vmul.f32 %v232, 1.442695
  %v266 = vpow.pop %v265
  %v267 = vmul.f32 %v233, 1.442695
  %v268 = vpow.pop %v267
  %v269 = vmul.f32 %v234, 1.442695
  %v270 = vpow.pop %v269
  %v271 = vmul.f32 %v235, 1.442695
  %v272 = vpow.pop %v271
  %v273 = vmul.f32 %v236, 1.442695
  %v274 = vpow.pop %v273
  %v275 = vmul.f32 %v237, 1.442695
  %v276 = vpow.pop %v275
  %v277 = vmul.f32 %v238, 1.442695
  %v278 = vpow.pop %v277
  %v279 = vmul.f32 %v239, 1.442695
  %v280 = vpow.pop %v279
  %v281 = vmul.f32 %v240, 1.442695
  %v282 = vpow.pop %v281
  %v283 = vmul.f32 %v241, 1.442695
  %v284 = vpow.pop %v283
  %v285 = vmul.f32 %v242, 1.442695
  %v286 = vpow.pop %v285
  %v287 = vmul.f32 %v243, 1.442695
  %v288 = vpow.pop %v287
  %v289 = vmul.f32 %v244, 1.442695
  %v290 = vpow.pop %v289
  %v291 = vmul.f32 %v245, 1.442695
  %v292 = vpow.pop %v291
  %v293 = vmul.f32 %v246, 1.442695
  %v294 = vpow.pop %v293
  %v295 = vmul.f32 %v247, 1.442695
  %v296 = vpow.pop %v295
  %v297 = vmul.f32 %v248, 1.442695
  %v298 = vpow.pop %v297
  %vm299 = vcmask 408576
  %300 = vst.msk [vmem:[%s3] sm:$0xff] %vm299, %v250
  %301 = vst.msk [vmem:[%s3 + $0x8] sm:$0xff] %vm299, %v252
  %302 = vst.msk [vmem:[%s3 + $0x10] sm:$0xff] %vm299, %v254
  %303 = vst.msk [vmem:[%s3 + $0x18] sm:$0xff] %vm299, %v256
  %304 = vst.msk [vmem:[%s3 + $0x20] sm:$0xff] %vm299, %v258
  %305 = vst.msk [vmem:[%s3 + $0x28] sm:$0xff] %vm299, %v260
  %306 = vst.msk [vmem:[%s3 + $0x30] sm:$0xff] %vm299, %v262
  %307 = vst.msk [vmem:[%s3 + $0x38] sm:$0xff] %vm299, %v264
  %308 = vst.msk [vmem:[%s3 + $0x40] sm:$0xff] %vm299, %v266
  %309 = vst.msk [vmem:[%s3 + $0x48] sm:$0xff] %vm299, %v268
  %310 = vst.msk [vmem:[%s3 + $0x50] sm:$0xff] %vm299, %v270
  %311 = vst.msk [vmem:[%s3 + $0x58] sm:$0xff] %vm299, %v272
  %312 = vst.msk [vmem:[%s3 + $0x60] sm:$0xff] %vm299, %v274
  %313 = vst.msk [vmem:[%s3 + $0x68] sm:$0xff] %vm299, %v276
  %314 = vst.msk [vmem:[%s3 + $0x70] sm:$0xff] %vm299, %v278
  %315 = vst.msk [vmem:[%s3 + $0x78] sm:$0xff] %vm299, %v280
  %316 = vst.msk [vmem:[%s3 + $0x80] sm:$0xff] %vm299, %v282
  %317 = vst.msk [vmem:[%s3 + $0x88] sm:$0xff] %vm299, %v284
  %318 = vst.msk [vmem:[%s3 + $0x90] sm:$0xff] %vm299, %v286
  %319 = vst.msk [vmem:[%s3 + $0x98] sm:$0xff] %vm299, %v288
  %320 = vst.msk [vmem:[%s3 + $0xa0] sm:$0xff] %vm299, %v290
  %321 = vst.msk [vmem:[%s3 + $0xa8] sm:$0xff] %vm299, %v292
  %322 = vst.msk [vmem:[%s3 + $0xb0] sm:$0xff] %vm299, %v294
  %323 = vst.msk [vmem:[%s3 + $0xb8] sm:$0xff] %vm299, %v296
  %324 = vst.msk [vmem:[%s3 + $0xc0] sm:$0xff] %vm299, %v298
  // Predicated region
  $region14: #{gaussian_smearing.1} parent=0 // pred_check
    _
  $region15: #{gaussian_smearing.1} parent=0 // pred_check_branch
    %326 = sbr.rel (0) target = $region17
  $region16: #{gaussian_smearing.1} parent=0 // pred_region
    _
  $region17: #{gaussian_smearing.1} parent=0 // pred_fallthru
    _
  // Predicated region
  $region18: #{gaussian_smearing.1} parent=0 // pred_check
    _
  $region19: #{gaussian_smearing.1} parent=0 // pred_check_branch
    %328 = sbr.rel (0) target = $region21
  $region20: #{gaussian_smearing.1} parent=0 // pred_region
    _
  $region21: #{gaussian_smearing.1} parent=0 // pred_fallthru
    _

</llo_original>
